<compile_context>
chip_gen: v7x
topology: tpu7x:2x2x1
jax: 0.10.0
libtpu: 0.0.40
codegen_flags: <defaults>
</compile_context>

<pallas_src>
import functools
import math

import jax
import jax.numpy as jnp
import numpy as np
from jax.experimental import pallas as pl
from jax.experimental.pallas import tpu as pltpu

LANE = 128


def _attnpool_kernel(x_ref, postp_ref, corr_ref, wqkv_ref, samehead_ref,
                     wc_ref, bc_ref, out_ref, *, blk):
    # x_ref       : (B, HW, C)    image tokens for this batch tile
    # postp_ref   : (HW, 3*blk)   post_pos @ W_qkv + b_qkv  (precomputed, f32)
    # corr_ref    : (1, 3*blk)    (pos0 - mean(post_pos)) @ W_qkv
    # wqkv_ref    : (C, 3*blk)    lane-aligned fused Q|K|V weight (Q pre-scaled)
    # samehead_ref: (blk, blk)    same-head indicator (zero outside [0:C,0:C])
    # wc_ref      : (blk, opad)   zero-padded output projection
    # bc_ref      : (1, opad)
    # out_ref     : (B, opad)
    B, HW, C = x_ref.shape

    # ---- fused Q|K|V projection of all image tokens: one MXU matmul --------
    x_flat = x_ref[...].reshape(B * HW, C)
    proj = (jnp.dot(x_flat, wqkv_ref[...], preferred_element_type=jnp.float32)
            .reshape(B, HW, 3 * blk) + postp_ref[...][None, :, :])

    # ---- mean-token projection = HW-mean of token projections + correction -
    proj0 = jnp.mean(proj, axis=1) + corr_ref[...]              # (B, 3*blk)

    q0 = proj0[:, 0:blk]                   # scaled query of the mean token
    k0 = proj0[:, blk:2 * blk]
    v0 = proj0[:, 2 * blk:3 * blk]
    k_tok = proj[:, :, blk:2 * blk]        # tile-aligned views, (B, HW, blk)
    v_tok = proj[:, :, 2 * blk:3 * blk]

    # ---- attention of the mean-token query over (mean token + image tokens) -
    # per-head scores replicated to channel width via one same-head matmul
    sh = samehead_ref[...]
    s_tok = jnp.dot((q0[:, None, :] * k_tok).reshape(B * HW, blk), sh,
                    preferred_element_type=jnp.float32).reshape(B, HW, blk)
    s0 = jnp.dot(q0 * k0, sh, preferred_element_type=jnp.float32)   # (B, blk)

    m = jnp.maximum(jnp.max(s_tok, axis=1), s0)                  # (B, blk)
    p_tok = jnp.exp(s_tok - m[:, None, :])                       # (B, HW, blk)
    p0 = jnp.exp(s0 - m)                                         # (B, blk)
    inv = pl.reciprocal(jnp.sum(p_tok, axis=1) + p0, approx=True)  # EUP slot

    o = (jnp.sum(p_tok * v_tok, axis=1) + p0 * v0) * inv         # (B, blk)

    out = (jnp.dot(o, wc_ref[...], preferred_element_type=jnp.float32)
           + bc_ref[...])                                        # (B, opad)
    out_ref[...] = out.astype(out_ref.dtype)                     # lane-dense vst


def _pick_batch_tile(n, target):
    """Batch tile <= target; prefer >=2 grid steps (v7x 2 TCs) and divisors of n."""
    if n <= target:
        if n >= 16 and n % 16 == 0:
            return n // 2                 # two steps -> both v7x cores busy
        return n
    cap = max(8, target - target % 8)
    for bt in range(cap, 7, -8):          # largest multiple of 8 dividing n
        if n % bt == 0:
            return bt                     # no padding pass needed
    return cap                            # fall back: ragged tail zero-padded


def attention_pool_2d(x, pos, wq, bq, wk, bk, wv, bv, wc, bc, num_heads,
                      batch_tile=256):
    """x: (N, C, H, W) float32.  Returns (N, output_dim)."""
    N, C, H, W = x.shape
    HW = H * W
    O = wc.shape[0]
    hd = C // num_heads
    scale = hd ** -0.5

    blk = pl.cdiv(C, LANE) * LANE          # per-projection lane-aligned width
    fdim = 3 * blk
    opad = pl.cdiv(O, LANE) * LANE

    # ---- trace-time constant prep (all f32, costs nothing per step) --------
    wqkv = jnp.zeros((C, fdim), jnp.float32)
    wqkv = wqkv.at[:, 0:C].set(wq.T * scale)             # attention scale folded
    wqkv = wqkv.at[:, blk:blk + C].set(wk.T)
    wqkv = wqkv.at[:, 2 * blk:2 * blk + C].set(wv.T)
    bqkv = jnp.zeros((fdim,), jnp.float32)
    bqkv = bqkv.at[0:C].set(bq * scale)
    bqkv = bqkv.at[blk:blk + C].set(bk)
    bqkv = bqkv.at[2 * blk:2 * blk + C].set(bv)

    pos0 = pos[0:1, :]                                    # (1, C)  mean token
    post = pos[1:, :]                                     # (HW, C) image tokens
    postp = post @ wqkv + bqkv[None, :]                   # (HW, fdim)
    corr = (pos0 - jnp.mean(post, axis=0, keepdims=True)) @ wqkv   # (1, fdim)

    ch = jnp.arange(blk)
    samehead = ((ch[:, None] < C) & (ch[None, :] < C) &
                (ch[:, None] // hd == ch[None, :] // hd)).astype(jnp.float32)

    wc_pad = jnp.zeros((blk, opad), jnp.float32).at[0:C, 0:O].set(wc.T)
    bc_pad = jnp.zeros((1, opad), jnp.float32).at[0, 0:O].set(bc)

    # ---- glue: NCHW -> (N, HW, C) token layout ------------------------------
    # TODO(synk): fuse this layout transpose into the upstream producer to save
    #             one HBM pass; there is no producer in this standalone script.
    x_tok = jnp.transpose(x.reshape(N, C, HW), (0, 2, 1))

    bt = _pick_batch_tile(N, batch_tile)
    n_pad = pl.cdiv(N, bt) * bt
    if n_pad != N:                                        # only for ragged N
        x_tok = jnp.pad(x_tok, ((0, n_pad - N), (0, 0), (0, 0)))

    kernel = functools.partial(_attnpool_kernel, blk=blk)
    rep2 = lambda i: (0, 0)

    out = pl.pallas_call(
        kernel,
        out_shape=jax.ShapeDtypeStruct((n_pad, opad), x.dtype),
        grid_spec=pltpu.PrefetchScalarGridSpec(
            num_scalar_prefetch=0,
            grid=(n_pad // bt,),
            in_specs=[
                pl.BlockSpec((bt, HW, C), lambda i: (i, 0, 0)),  # x tokens
                pl.BlockSpec((HW, fdim), rep2),    # projected pos + biases
                pl.BlockSpec((1, fdim), rep2),     # mean-token correction row
                pl.BlockSpec((C, fdim), rep2),     # fused Q|K|V weight
                pl.BlockSpec((blk, blk), rep2),    # same-head indicator
                pl.BlockSpec((blk, opad), rep2),   # output projection (padded)
                pl.BlockSpec((1, opad), rep2),     # output bias (padded)
            ],
            out_specs=pl.BlockSpec((bt, opad), lambda i: (i, 0)),
        ),
        compiler_params=pltpu.CompilerParams(
            dimension_semantics=("parallel",),
            # conservative everywhere (v7x has only 64 MiB physical VMEM);
            # raise towards 64-96 MiB on v5e/v6e when sweeping batch_tile up.
            vmem_limit_bytes=32 * 1024 * 1024),
    )(x_tok, postp, corr, wqkv, samehead, wc_pad, bc_pad)

    return out[:N, :O]


def reference_forward(x, pos, wq, bq, wk, bk, wv, bv, wc, bc, num_heads):
    N, C, H, W = x.shape
    xt = jnp.transpose(x.reshape(N, C, H * W), (2, 0, 1))           # (HW, N, C)
    xt = jnp.concatenate([xt.mean(axis=0, keepdims=True), xt], 0)   # (L, N, C)
    xt = xt + pos[:, None, :]
    L = xt.shape[0]
    hd = C // num_heads
    q = xt @ wq.T + bq
    k = xt @ wk.T + bk
    v = xt @ wv.T + bv
    q = q.reshape(L, N, num_heads, hd) * (hd ** -0.5)
    k = k.reshape(L, N, num_heads, hd)
    v = v.reshape(L, N, num_heads, hd)
    s = jnp.einsum('qnhd,knhd->nhqk', q, k)
    p = jax.nn.softmax(s, axis=-1)
    o = jnp.einsum('nhqk,knhd->qnhd', p, v).reshape(L, N, C)
    out = o @ wc.T + bc
    return out[0]


if __name__ == "__main__":
    # module config (small, consistent with AttentionPool2d.__init__)
    N, embed_dim, H, W = 2, 32, 4, 4          # spacial_dim = 4
    num_heads = 4
    output_dim = 16
    L = H * W + 1

    key = jax.random.PRNGKey(0)
    ks = jax.random.split(key, 10)
    x = jax.random.normal(ks[0], (N, embed_dim, H, W), jnp.float32)
    pos = jax.random.normal(ks[1], (L, embed_dim), jnp.float32) / math.sqrt(embed_dim)
    wq = jax.random.normal(ks[2], (embed_dim, embed_dim), jnp.float32) * 0.08
    wk = jax.random.normal(ks[3], (embed_dim, embed_dim), jnp.float32) * 0.08
    wv = jax.random.normal(ks[4], (embed_dim, embed_dim), jnp.float32) * 0.08
    wc = jax.random.normal(ks[5], (output_dim, embed_dim), jnp.float32) * 0.08
    bq = jax.random.normal(ks[6], (embed_dim,), jnp.float32) * 0.02
    bk = jax.random.normal(ks[7], (embed_dim,), jnp.float32) * 0.02
    bv = jax.random.normal(ks[8], (embed_dim,), jnp.float32) * 0.02
    bc = jax.random.normal(ks[9], (output_dim,), jnp.float32) * 0.02

    out = attention_pool_2d(x, pos, wq, bq, wk, bk, wv, bv, wc, bc, num_heads)
    out = jax.block_until_ready(out)

    ref = reference_forward(x, pos, wq, bq, wk, bk, wv, bv, wc, bc, num_heads)
    np.testing.assert_allclose(np.asarray(out), np.asarray(ref), rtol=2e-3, atol=2e-3)

    print("KERNEL_OK")
</pallas_src>

<mosaic_0001>
module attributes {stable_mosaic.version = 11 : i64} {
  func.func @_attnpool_kernel(%arg0: i32, %arg1: memref<2x16x32xf32, #tpu.memory_space<vmem>>, %arg2: memref<16x384xf32, #tpu.memory_space<vmem>>, %arg3: memref<1x384xf32, #tpu.memory_space<vmem>>, %arg4: memref<32x384xf32, #tpu.memory_space<vmem>>, %arg5: memref<128x128xf32, #tpu.memory_space<vmem>>, %arg6: memref<128x128xf32, #tpu.memory_space<vmem>>, %arg7: memref<1x128xf32, #tpu.memory_space<vmem>>, %arg8: memref<2x128xf32, #tpu.memory_space<vmem>>) attributes {dimension_semantics = [#tpu.dimension_semantics<parallel>], iteration_bounds = array<i64: 1>, scalar_prefetch = 0 : i64, scratch_operands = 0 : i64, tpu.core_type = #tpu.core_type<tc>, window_params = [{transform_indices = @transform_0, window_bounds = array<i64: 2, 16, 32>}, {pipeline_mode = #tpu.pipeline_mode<synchronous>, transform_indices = @transform_1, window_bounds = array<i64: 16, 384>}, {pipeline_mode = #tpu.pipeline_mode<synchronous>, transform_indices = @transform_2, window_bounds = array<i64: 1, 384>}, {pipeline_mode = #tpu.pipeline_mode<synchronous>, transform_indices = @transform_3, window_bounds = array<i64: 32, 384>}, {pipeline_mode = #tpu.pipeline_mode<synchronous>, transform_indices = @transform_4, window_bounds = array<i64: 128, 128>}, {pipeline_mode = #tpu.pipeline_mode<synchronous>, transform_indices = @transform_5, window_bounds = array<i64: 128, 128>}, {pipeline_mode = #tpu.pipeline_mode<synchronous>, transform_indices = @transform_6, window_bounds = array<i64: 1, 128>}, {transform_indices = @transform_7, window_bounds = array<i64: 2, 128>}]} {
    %c0 = arith.constant 0 : index
    %c0_0 = arith.constant 0 : index
    %c0_1 = arith.constant 0 : index
    %0 = vector.load %arg1[%c0, %c0_0, %c0_1] : memref<2x16x32xf32, #tpu.memory_space<vmem>>, vector<2x16x32xf32>
    %1 = vector.shape_cast %0 : vector<2x16x32xf32> to vector<32x32xf32>
    %c0_2 = arith.constant 0 : index
    %c0_3 = arith.constant 0 : index
    %2 = vector.load %arg4[%c0_2, %c0_3] : memref<32x384xf32, #tpu.memory_space<vmem>>, vector<32x384xf32>
    %cst = arith.constant dense<0.000000e+00> : vector<32x384xf32>
    %3 = tpu.matmul %1, %2, %cst {dimension_numbers = #tpu.dot_dimension_numbers<[1], [0], [0], [1], [0, 0, 1, 1], [], []>} : vector<32x32xf32>, vector<32x384xf32>, vector<32x384xf32> -> vector<32x384xf32>
    %4 = vector.shape_cast %3 : vector<32x384xf32> to vector<2x16x384xf32>
    %c0_4 = arith.constant 0 : index
    %c0_5 = arith.constant 0 : index
    %5 = vector.load %arg2[%c0_4, %c0_5] : memref<16x384xf32, #tpu.memory_space<vmem>>, vector<16x384xf32>
    %6 = vector.shape_cast %5 : vector<16x384xf32> to vector<1x16x384xf32>
    %7 = vector.broadcast %6 : vector<1x16x384xf32> to vector<2x16x384xf32>
    %8 = arith.addf %4, %7 : vector<2x16x384xf32>
    %cst_6 = arith.constant dense<0.000000e+00> : vector<2x384xf32>
    %9 = vector.multi_reduction <add>, %8, %cst_6 [1] : vector<2x16x384xf32> to vector<2x384xf32>
    %cst_7 = arith.constant 1.600000e+01 : f32
    %10 = vector.broadcast %cst_7 : f32 to vector<2x384xf32>
    %11 = arith.divf %9, %10 : vector<2x384xf32>
    %c0_8 = arith.constant 0 : index
    %c0_9 = arith.constant 0 : index
    %12 = vector.load %arg3[%c0_8, %c0_9] : memref<1x384xf32, #tpu.memory_space<vmem>>, vector<1x384xf32>
    %13 = vector.broadcast %12 : vector<1x384xf32> to vector<2x384xf32>
    %14 = arith.addf %11, %13 : vector<2x384xf32>
    %15 = vector.extract_strided_slice %14 {offsets = [0, 0], sizes = [2, 128], strides = [1, 1]} : vector<2x384xf32> to vector<2x128xf32>
    %16 = vector.extract_strided_slice %14 {offsets = [0, 128], sizes = [2, 128], strides = [1, 1]} : vector<2x384xf32> to vector<2x128xf32>
    %17 = vector.extract_strided_slice %14 {offsets = [0, 256], sizes = [2, 128], strides = [1, 1]} : vector<2x384xf32> to vector<2x128xf32>
    %18 = vector.extract_strided_slice %8 {offsets = [0, 0, 128], sizes = [2, 16, 128], strides = [1, 1, 1]} : vector<2x16x384xf32> to vector<2x16x128xf32>
    %19 = vector.extract_strided_slice %8 {offsets = [0, 0, 256], sizes = [2, 16, 128], strides = [1, 1, 1]} : vector<2x16x384xf32> to vector<2x16x128xf32>
    %c0_10 = arith.constant 0 : index
    %c0_11 = arith.constant 0 : index
    %20 = vector.load %arg5[%c0_10, %c0_11] : memref<128x128xf32, #tpu.memory_space<vmem>>, vector<128x128xf32>
    %21 = vector.shape_cast %15 : vector<2x128xf32> to vector<2x1x128xf32>
    %22 = vector.broadcast %21 : vector<2x1x128xf32> to vector<2x16x128xf32>
    %23 = arith.mulf %22, %18 : vector<2x16x128xf32>
    %24 = vector.shape_cast %23 : vector<2x16x128xf32> to vector<32x128xf32>
    %cst_12 = arith.constant dense<0.000000e+00> : vector<32x128xf32>
    %25 = tpu.matmul %24, %20, %cst_12 {dimension_numbers = #tpu.dot_dimension_numbers<[1], [0], [0], [1], [0, 0, 1, 1], [], []>} : vector<32x128xf32>, vector<128x128xf32>, vector<32x128xf32> -> vector<32x128xf32>
    %26 = vector.shape_cast %25 : vector<32x128xf32> to vector<2x16x128xf32>
    %27 = arith.mulf %15, %16 : vector<2x128xf32>
    %cst_13 = arith.constant dense<0.000000e+00> : vector<2x128xf32>
    %28 = tpu.matmul %27, %20, %cst_13 {dimension_numbers = #tpu.dot_dimension_numbers<[1], [0], [0], [1], [0, 0, 1, 1], [], []>} : vector<2x128xf32>, vector<128x128xf32>, vector<2x128xf32> -> vector<2x128xf32>
    %cst_14 = arith.constant dense<0xFF800000> : vector<2x128xf32>
    %29 = vector.multi_reduction <maximumf>, %26, %cst_14 [1] : vector<2x16x128xf32> to vector<2x128xf32>
    %30 = arith.maximumf %29, %28 : vector<2x128xf32>
    %31 = vector.shape_cast %30 : vector<2x128xf32> to vector<2x1x128xf32>
    %32 = vector.broadcast %31 : vector<2x1x128xf32> to vector<2x16x128xf32>
    %33 = arith.subf %26, %32 : vector<2x16x128xf32>
    %34 = math.exp %33 : vector<2x16x128xf32>
    %35 = arith.subf %28, %30 : vector<2x128xf32>
    %36 = math.exp %35 : vector<2x128xf32>
    %cst_15 = arith.constant dense<0.000000e+00> : vector<2x128xf32>
    %37 = vector.multi_reduction <add>, %34, %cst_15 [1] : vector<2x16x128xf32> to vector<2x128xf32>
    %38 = arith.addf %37, %36 : vector<2x128xf32>
    %39 = tpu.reciprocal %38 {approx = true} : vector<2x128xf32> -> vector<2x128xf32>
    %40 = arith.mulf %34, %19 : vector<2x16x128xf32>
    %cst_16 = arith.constant dense<0.000000e+00> : vector<2x128xf32>
    %41 = vector.multi_reduction <add>, %40, %cst_16 [1] : vector<2x16x128xf32> to vector<2x128xf32>
    %42 = arith.mulf %36, %17 : vector<2x128xf32>
    %43 = arith.addf %41, %42 : vector<2x128xf32>
    %44 = arith.mulf %43, %39 : vector<2x128xf32>
    %c0_17 = arith.constant 0 : index
    %c0_18 = arith.constant 0 : index
    %45 = vector.load %arg6[%c0_17, %c0_18] : memref<128x128xf32, #tpu.memory_space<vmem>>, vector<128x128xf32>
    %cst_19 = arith.constant dense<0.000000e+00> : vector<2x128xf32>
    %46 = tpu.matmul %44, %45, %cst_19 {dimension_numbers = #tpu.dot_dimension_numbers<[1], [0], [0], [1], [0, 0, 1, 1], [], []>} : vector<2x128xf32>, vector<128x128xf32>, vector<2x128xf32> -> vector<2x128xf32>
    %c0_20 = arith.constant 0 : index
    %c0_21 = arith.constant 0 : index
    %47 = vector.load %arg7[%c0_20, %c0_21] : memref<1x128xf32, #tpu.memory_space<vmem>>, vector<1x128xf32>
    %48 = vector.broadcast %47 : vector<1x128xf32> to vector<2x128xf32>
    %49 = arith.addf %46, %48 : vector<2x128xf32>
    %c0_22 = arith.constant 0 : index
    %c0_23 = arith.constant 0 : index
    %50 = vector.load %arg8[%c0_22, %c0_23] : memref<2x128xf32, #tpu.memory_space<vmem>>, vector<2x128xf32>
    tpu.vector_store %arg8[%c0_22, %c0_23], %49 {strides = array<i32>} : memref<2x128xf32, #tpu.memory_space<vmem>>, vector<2x128xf32>,
    return
  }
  func.func @transform_0(%arg0: i32) -> (i32, i32, i32) {
    %c0_i32 = arith.constant 0 : i32
    %c0_i32_0 = arith.constant 0 : i32
    %c0_i32_1 = arith.constant 0 : i32
    return %arg0, %c0_i32, %c0_i32_0 : i32, i32, i32
  }
  func.func @transform_1(%arg0: i32) -> (i32, i32) {
    %c0_i32 = arith.constant 0 : i32
    %c0_i32_0 = arith.constant 0 : i32
    %c0_i32_1 = arith.constant 0 : i32
    return %c0_i32, %c0_i32_0 : i32, i32
  }
  func.func @transform_2(%arg0: i32) -> (i32, i32) {
    %c0_i32 = arith.constant 0 : i32
    %c0_i32_0 = arith.constant 0 : i32
    %c0_i32_1 = arith.constant 0 : i32
    return %c0_i32, %c0_i32_0 : i32, i32
  }
  func.func @transform_3(%arg0: i32) -> (i32, i32) {
    %c0_i32 = arith.constant 0 : i32
    %c0_i32_0 = arith.constant 0 : i32
    %c0_i32_1 = arith.constant 0 : i32
    return %c0_i32, %c0_i32_0 : i32, i32
  }
  func.func @transform_4(%arg0: i32) -> (i32, i32) {
    %c0_i32 = arith.constant 0 : i32
    %c0_i32_0 = arith.constant 0 : i32
    %c0_i32_1 = arith.constant 0 : i32
    return %c0_i32, %c0_i32_0 : i32, i32
  }
  func.func @transform_5(%arg0: i32) -> (i32, i32) {
    %c0_i32 = arith.constant 0 : i32
    %c0_i32_0 = arith.constant 0 : i32
    %c0_i32_1 = arith.constant 0 : i32
    return %c0_i32, %c0_i32_0 : i32, i32
  }
  func.func @transform_6(%arg0: i32) -> (i32, i32) {
    %c0_i32 = arith.constant 0 : i32
    %c0_i32_0 = arith.constant 0 : i32
    %c0_i32_1 = arith.constant 0 : i32
    return %c0_i32, %c0_i32_0 : i32, i32
  }
  func.func @transform_7(%arg0: i32) -> (i32, i32) {
    %c0_i32 = arith.constant 0 : i32
    %c0_i32_0 = arith.constant 0 : i32
    return %arg0, %c0_i32 : i32, i32
  }
}

</mosaic_0001>

<llo_original>
// kernel: tpu_custom_call.1
$region0: #{tpu_custom_call.1}
  #allocation0 [shape = 'u32[]', space=smem, size = 0x4, offset = 0x4, fixed_abs, tag = 'smem constant byte address 0x4 - core index']
  #allocation1 [shape = 'u32[144,128]{1,0:T(1,128)}', space=vmem, size = 0x12000, scoped, tag = 'internal scratch']
  %s0 = inlined_call_operand.hbm [shape: f32[2,16,32], index: 0, kind: input, shape index: {}]
  %s1 = inlined_call_operand.hbm [shape: f32[16,384], index: 1, kind: input, shape index: {}]
  %s2 = inlined_call_operand.vmem [shape: f32[1,384], index: 2, kind: input, shape index: {}]
  %s3 = inlined_call_operand.hbm [shape: f32[32,384], index: 3, kind: input, shape index: {}]
  %s4 = inlined_call_operand.hbm [shape: f32[128,128], index: 4, kind: input, shape index: {}]
  %s5 = inlined_call_operand.hbm [shape: f32[128,128], index: 5, kind: input, shape index: {}]
  %s6 = inlined_call_operand.vmem [shape: f32[1,128], index: 6, kind: input, shape index: {}]
  %s7 = inlined_call_operand.hbm [shape: f32[2,128], index: 7, kind: output, shape index: {}]
  %s8 = sld [smem:[#allocation0]]
  $region58: #{tpu_custom_call.1} parent=0
    _
  %s10 = ssub.s32 1, %s8
  %s11 = scalar_select 0, %s10, %s8
  $region1: #{tpu_custom_call.1} parent=0
    #allocation2 [shape = 'u8[16384]{0}', space=vmem, size = 0x4000, scoped, tag = 'input window, operand 0, single buffered']
    #allocation3 [shape = 's32[1]{0}', space=sflag, size = 0x4, scoped, tag = 'scoped memory for tpu_custom_call.1']
    #allocation4 [shape = 's32[1]{0}', space=sflag, size = 0x4, scoped, tag = 'scoped memory for tpu_custom_call.1']
    #allocation5 [shape = 'u8[24576]{0}', space=vmem, size = 0x6000, scoped, tag = 'input window, operand 1, single buffered']
    #allocation6 [shape = 's32[1]{0}', space=sflag, size = 0x4, scoped, tag = 'scoped memory for tpu_custom_call.1']
    #allocation7 [shape = 'u8[49152]{0}', space=vmem, size = 0xc000, scoped, tag = 'input window, operand 3, single buffered']
    #allocation8 [shape = 'u8[65536]{0}', space=vmem, size = 0x10000, scoped, tag = 'input window, operand 4, single buffered']
    #allocation9 [shape = 's32[1]{0}', space=sflag, size = 0x4, scoped, tag = 'scoped memory for tpu_custom_call.1']
    #allocation10 [shape = 'u8[65536]{0}', space=vmem, size = 0x10000, scoped, tag = 'input window, operand 5, single buffered']
    #allocation11 [shape = 'u8[1024]{0}', space=vmem, size = 0x400, scoped, tag = 'output window, operand 0, single buffered']
    %12 = vsyncpa [#allocation3], 0
    %13 = vsyncpa [#allocation6], 0
    %14 = vsyncpa [#allocation9], 0
    %15 = vsyncpa [#allocation4], 0
    // Predicated region
    $region2: #{tpu_custom_call.1} parent=1 // pred_check
      _
    $region3: #{tpu_custom_call.1} parent=1 // pred_check_branch
      %17 = sbr.rel (0) target = $region5
    $region4: #{tpu_custom_call.1} parent=1 // pred_region
      %s19 = ssub.s32 512, 512
      %20 = vsyncadd [#allocation3], %s19
      %s21 = sshll.u32 [#allocation2], 4
      %s22 = int_to_ptr.vmem [resolvable:$true] %s21
      %27 = dma.hbm_to_vmem [thread:$0]  %s0, 512, %s22, [#allocation3], 128, 128, 8
    $region5: #{tpu_custom_call.1} parent=1 // pred_fallthru
      _
    // Predicated region
    $region6: #{tpu_custom_call.1} parent=1 // pred_check
      _
    $region7: #{tpu_custom_call.1} parent=1 // pred_check_branch
      %29 = sbr.rel (0) target = $region9
    $region8: #{tpu_custom_call.1} parent=1 // pred_region
      %s31 = ssub.s32 768, 768
      %32 = vsyncadd [#allocation6], %s31
      %s33 = sshll.u32 [#allocation5], 4
      %s34 = int_to_ptr.vmem [resolvable:$true] %s33
      %39 = dma.hbm_to_vmem [thread:$0]  %s1, 768, %s34, [#allocation6], 384, 384, 24
    $region9: #{tpu_custom_call.1} parent=1 // pred_fallthru
      _
    // Predicated region
    $region10: #{tpu_custom_call.1} parent=1 // pred_check
      _
    $region11: #{tpu_custom_call.1} parent=1 // pred_check_branch
      %41 = sbr.rel (0) target = $region13
    $region12: #{tpu_custom_call.1} parent=1 // pred_region
      _
    $region13: #{tpu_custom_call.1} parent=1 // pred_fallthru
      _
    // Predicated region
    $region14: #{tpu_custom_call.1} parent=1 // pred_check
      _
    $region15: #{tpu_custom_call.1} parent=1 // pred_check_branch
      %43 = sbr.rel (0) target = $region17
    $region16: #{tpu_custom_call.1} parent=1 // pred_region
      %s45 = ssub.s32 1536, 1536
      %46 = vsyncadd [#allocation6], %s45
      %s47 = sshll.u32 [#allocation7], 4
      %s48 = int_to_ptr.vmem [resolvable:$true] %s47
      %53 = dma.hbm_to_vmem [thread:$0]  %s3, 1536, %s48, [#allocation6], 384, 384, 24
    $region17: #{tpu_custom_call.1} parent=1 // pred_fallthru
      _
    // Predicated region
    $region18: #{tpu_custom_call.1} parent=1 // pred_check
      _
    $region19: #{tpu_custom_call.1} parent=1 // pred_check_branch
      %55 = sbr.rel (0) target = $region21
    $region20: #{tpu_custom_call.1} parent=1 // pred_region
      %s57 = ssub.s32 2048, 2048
      %58 = vsyncadd [#allocation9], %s57
      %s59 = sshll.u32 [#allocation8], 4
      %s60 = int_to_ptr.vmem [resolvable:$true] %s59
      %65 = dma.hbm_to_vmem [thread:$0]  %s4, 2048, %s60, [#allocation9], 128, 128, 8
    $region21: #{tpu_custom_call.1} parent=1 // pred_fallthru
      _
    // Predicated region
    $region22: #{tpu_custom_call.1} parent=1 // pred_check
      _
    $region23: #{tpu_custom_call.1} parent=1 // pred_check_branch
      %67 = sbr.rel (0) target = $region25
    $region24: #{tpu_custom_call.1} parent=1 // pred_region
      %s69 = ssub.s32 2048, 2048
      %70 = vsyncadd [#allocation9], %s69
      %s71 = sshll.u32 [#allocation10], 4
      %s72 = int_to_ptr.vmem [resolvable:$true] %s71
      %77 = dma.hbm_to_vmem [thread:$0]  %s5, 2048, %s72, [#allocation9], 128, 128, 8
    $region25: #{tpu_custom_call.1} parent=1 // pred_fallthru
      _
    // Predicated region
    $region26: #{tpu_custom_call.1} parent=1 // pred_check
      _
    $region27: #{tpu_custom_call.1} parent=1 // pred_check_branch
      %79 = sbr.rel (0) target = $region29
    $region28: #{tpu_custom_call.1} parent=1 // pred_region
      _
    $region29: #{tpu_custom_call.1} parent=1 // pred_fallthru
      _
    // Predicated region
    $region30: #{tpu_custom_call.1} parent=1 // pred_check
      _
    $region31: #{tpu_custom_call.1} parent=1 // pred_check_branch
      %81 = sbr.rel (0) target = $region33
    $region32: #{tpu_custom_call.1} parent=1 // pred_region
      %82 = dma.done [#allocation3], 512
    $region33: #{tpu_custom_call.1} parent=1 // pred_fallthru
      _
    // Predicated region
    $region34: #{tpu_custom_call.1} parent=1 // pred_check
      _
    $region35: #{tpu_custom_call.1} parent=1 // pred_check_branch
      %84 = sbr.rel (0) target = $region37
    $region36: #{tpu_custom_call.1} parent=1 // pred_region
      %85 = dma.done [#allocation6], 768
    $region37: #{tpu_custom_call.1} parent=1 // pred_fallthru
      _
    // Predicated region
    $region38: #{tpu_custom_call.1} parent=1 // pred_check
      _
    $region39: #{tpu_custom_call.1} parent=1 // pred_check_branch
      %87 = sbr.rel (0) target = $region41
    $region40: #{tpu_custom_call.1} parent=1 // pred_region
      %88 = dma.done [#allocation6], 1536
    $region41: #{tpu_custom_call.1} parent=1 // pred_fallthru
      _
    // Predicated region
    $region42: #{tpu_custom_call.1} parent=1 // pred_check
      _
    $region43: #{tpu_custom_call.1} parent=1 // pred_check_branch
      %90 = sbr.rel (0) target = $region45
    $region44: #{tpu_custom_call.1} parent=1 // pred_region
      %91 = dma.done [#allocation9], 2048
    $region45: #{tpu_custom_call.1} parent=1 // pred_fallthru
      _
    // Predicated region
    $region46: #{tpu_custom_call.1} parent=1 // pred_check
      _
    $region47: #{tpu_custom_call.1} parent=1 // pred_check_branch
      %93 = sbr.rel (0) target = $region49
    $region48: #{tpu_custom_call.1} parent=1 // pred_region
      %94 = dma.done [#allocation9], 2048
    $region49: #{tpu_custom_call.1} parent=1 // pred_fallthru
      _
    %v95 = vld [vmem:[#allocation2] sm:$0xff]
    %v96 = vld [vmem:[#allocation2 + $0x8] sm:$0xff]
    %v97 = vld [vmem:[#allocation2 + $0x10] sm:$0xff]
    %v98 = vld [vmem:[#allocation2 + $0x18] sm:$0xff]
    %v99 = vld [vmem:[#allocation7] sm:$0xff]
    %v100 = vld [vmem:[#allocation7 + $0x8] sm:$0xff]
    %v101 = vld [vmem:[#allocation7 + $0x10] sm:$0xff]
    %v102 = vld [vmem:[#allocation7 + $0x18] sm:$0xff]
    %v103 = vld [vmem:[#allocation7 + $0x20] sm:$0xff]
    %v104 = vld [vmem:[#allocation7 + $0x28] sm:$0xff]
    %v105 = vld [vmem:[#allocation7 + $0x30] sm:$0xff]
    %v106 = vld [vmem:[#allocation7 + $0x38] sm:$0xff]
    %v107 = vld [vmem:[#allocation7 + $0x40] sm:$0xff]
    %v108 = vld [vmem:[#allocation7 + $0x48] sm:$0xff]
    %v109 = vld [vmem:[#allocation7 + $0x50] sm:$0xff]
    %v110 = vld [vmem:[#allocation7 + $0x58] sm:$0xff]
    %vm111 = vcmask 261120
    %v113 = vsel %vm111, %v95, 0
    %v116 = vsel %vm111, %v96, 0
    %v119 = vsel %vm111, %v97, 0
    %v122 = vsel %vm111, %v98, 0
    %124 = vmatprep.subr.mxu0 %v100
    %125 = vmatpush1.msra.mxu0 %v99
    %126 = vmatprep.subr.mxu0 %v103
    %127 = vmatpush1.msra.mxu0 %v102
    %128 = vmatprep.subr.mxu0 %v106
    %129 = vmatpush1.msra.mxu0 %v105
    %130 = vmatprep.subr.mxu0 %v109
    %131 = vmatpush1.msra.mxu0 %v108
    %132 = vmatprep.subr.mxu0 0.0
    %133 = vmatpush1.msra.mxu0 0.0
    %134 = vmatprep.subr.mxu0 0.0
    %135 = vmatpush1.msra.mxu0 0.0
    %136 = vmatprep.subr.mxu0 0.0
    %137 = vmatpush1.msra.mxu0 0.0
    %138 = vmatprep.subr.mxu0 0.0
    %139 = vmatpush1.msra.mxu0 0.0
    %140 = vmatprep.subr.mxu0 0.0
    %141 = vmatpush1.msra.mxu0 0.0
    %142 = vmatprep.subr.mxu0 0.0
    %143 = vmatpush1.msra.mxu0 0.0
    %144 = vmatprep.subr.mxu0 0.0
    %145 = vmatpush1.msra.mxu0 0.0
    %146 = vmatprep.subr.mxu0 0.0
    %147 = vmatpush1.msra.mxu0 0.0
    %148 = vmatprep.subr.mxu0 0.0
    %149 = vmatpush1.msra.mxu0 0.0
    %150 = vmatprep.subr.mxu0 0.0
    %151 = vmatpush1.msra.mxu0 0.0
    %152 = vmatprep.subr.mxu0 0.0
    %153 = vmatpush1.msra.mxu0 0.0
    %154 = vmatprep.subr.mxu0 0.0
    %155 = vmatpush1.msra.mxu0 0.0
    %156 = vmatprep.subr.mxu0 0.0
    %157 = vmatpush1.msra.mxu0 0.0
    %158 = vmatprep.subr.mxu0 0.0
    %159 = vmatpush1.msra.mxu0 0.0
    %160 = vmatprep.subr.mxu0 0.0
    %161 = vmatpush1.msra.mxu0 0.0
    %162 = vmatprep.subr.mxu0 0.0
    %163 = vmatpush1.msra.mxu0 0.0
    %164 = vmatprep.subr.mxu0 0.0
    %165 = vmatpush1.msra.mxu0 0.0
    %166 = vmatprep.subr.mxu0 0.0
    %167 = vmatpush1.msra.mxu0 0.0
    %168 = vmatprep.subr.mxu0 0.0
    %169 = vmatpush1.msra.mxu0 0.0
    %170 = vmatprep.subr.mxu0 0.0
    %171 = vmatpush1.msra.mxu0 0.0
    %172 = vmatprep.subr.mxu0 0.0
    %173 = vmatpush1.msra.mxu0 0.0
    %174 = vmatprep.subr.mxu0 0.0
    %175 = vmatpush1.msra.mxu0 0.0
    %176 = vmatprep.subr.mxu0 0.0
    %177 = vmatpush1.msra.mxu0 0.0
    %178 = vmatprep.subr.mxu0 0.0
    %179 = vmatpush1.msra.mxu0 0.0
    %180 = vmatprep.subr.mxu0 0.0
    %181 = vmatpush1.msra.mxu0 0.0
    %182 = vmatprep.subr.mxu0 0.0
    %183 = vmatpush1.msra.mxu0 0.0
    %184 = vmatprep.subr.mxu0 0.0
    %185 = vmatpush1.msra.mxu0 0.0
    %186 = vmatprep.subr.mxu0 0.0
    %187 = vmatpush1.msra.mxu0 0.0
    %188 = vmatprep.mubr.f32.mxu0 0.0
    %189 = vmatmul.mubr.f32.gmra.mrb[0].mxu0 %v113
    %v190 = vpop.f32.mrb[0].mxu0
    %v191 = vadd.f32 0.0, %v190
    %v192 = vpop.f32.mrb[0].mxu0
    %v193 = vadd.f32 0.0, %v192
    %194 = vmatprep.mubr.f32.mxu0 0.0
    %195 = vmatmul.mubr.f32.gmra.mrb[0].mxu0 %v116
    %v196 = vpop.f32.mrb[0].mxu0
    %v197 = vadd.f32 0.0, %v196
    %v198 = vpop.f32.mrb[0].mxu0
    %v199 = vadd.f32 0.0, %v198
    %200 = vmatprep.mubr.f32.mxu0 0.0
    %201 = vmatmul.mubr.f32.gmra.mrb[0].mxu0 %v119
    %v202 = vpop.f32.mrb[0].mxu0
    %v203 = vadd.f32 0.0, %v202
    %v204 = vpop.f32.mrb[0].mxu0
    %v205 = vadd.f32 0.0, %v204
    %206 = vmatprep.mubr.f32.mxu0 0.0
    %207 = vmatmul.mubr.f32.gmra.mrb[0].mxu0 %v122
    %v208 = vpop.f32.mrb[0].mxu0
    %v209 = vadd.f32 0.0, %v208
    %v210 = vpop.f32.mrb[0].mxu0
    %v211 = vadd.f32 0.0, %v210
    %212 = vdwg.mxu0
    %213 = vmatprep.subr.mxu0 0.0
    %214 = vmatpush1.msra.mxu0 %v101
    %215 = vmatprep.subr.mxu0 0.0
    %216 = vmatpush1.msra.mxu0 %v104
    %217 = vmatprep.subr.mxu0 0.0
    %218 = vmatpush1.msra.mxu0 %v107
    %219 = vmatprep.subr.mxu0 0.0
    %220 = vmatpush1.msra.mxu0 %v110
    %221 = vmatprep.subr.mxu0 0.0
    %222 = vmatpush1.msra.mxu0 0.0
    %223 = vmatprep.subr.mxu0 0.0
    %224 = vmatpush1.msra.mxu0 0.0
    %225 = vmatprep.subr.mxu0 0.0
    %226 = vmatpush1.msra.mxu0 0.0
    %227 = vmatprep.subr.mxu0 0.0
    %228 = vmatpush1.msra.mxu0 0.0
    %229 = vmatprep.subr.mxu0 0.0
    %230 = vmatpush1.msra.mxu0 0.0
    %231 = vmatprep.subr.mxu0 0.0
    %232 = vmatpush1.msra.mxu0 0.0
    %233 = vmatprep.subr.mxu0 0.0
    %234 = vmatpush1.msra.mxu0 0.0
    %235 = vmatprep.subr.mxu0 0.0
    %236 = vmatpush1.msra.mxu0 0.0
    %237 = vmatprep.subr.mxu0 0.0
    %238 = vmatpush1.msra.mxu0 0.0
    %239 = vmatprep.subr.mxu0 0.0
    %240 = vmatpush1.msra.mxu0 0.0
    %241 = vmatprep.subr.mxu0 0.0
    %242 = vmatpush1.msra.mxu0 0.0
    %243 = vmatprep.subr.mxu0 0.0
    %244 = vmatpush1.msra.mxu0 0.0
    %245 = vmatprep.subr.mxu0 0.0
    %246 = vmatpush1.msra.mxu0 0.0
    %247 = vmatprep.subr.mxu0 0.0
    %248 = vmatpush1.msra.mxu0 0.0
    %249 = vmatprep.subr.mxu0 0.0
    %250 = vmatpush1.msra.mxu0 0.0
    %251 = vmatprep.subr.mxu0 0.0
    %252 = vmatpush1.msra.mxu0 0.0
    %253 = vmatprep.subr.mxu0 0.0
    %254 = vmatpush1.msra.mxu0 0.0
    %255 = vmatprep.subr.mxu0 0.0
    %256 = vmatpush1.msra.mxu0 0.0
    %257 = vmatprep.subr.mxu0 0.0
    %258 = vmatpush1.msra.mxu0 0.0
    %259 = vmatprep.subr.mxu0 0.0
    %260 = vmatpush1.msra.mxu0 0.0
    %261 = vmatprep.subr.mxu0 0.0
    %262 = vmatpush1.msra.mxu0 0.0
    %263 = vmatprep.subr.mxu0 0.0
    %264 = vmatpush1.msra.mxu0 0.0
    %265 = vmatprep.subr.mxu0 0.0
    %266 = vmatpush1.msra.mxu0 0.0
    %267 = vmatprep.subr.mxu0 0.0
    %268 = vmatpush1.msra.mxu0 0.0
    %269 = vmatprep.subr.mxu0 0.0
    %270 = vmatpush1.msra.mxu0 0.0
    %271 = vmatprep.subr.mxu0 0.0
    %272 = vmatpush1.msra.mxu0 0.0
    %273 = vmatprep.subr.mxu0 0.0
    %274 = vmatpush1.msra.mxu0 0.0
    %275 = vmatprep.subr.mxu0 0.0
    %276 = vmatpush1.msra.mxu0 0.0
    %277 = vmatprep.mubr.f32.mxu0 0.0
    %278 = vmatmul.mubr.f32.gmra.mrb[0].mxu0 %v113
    %v279 = vpop.f32.mrb[0].mxu0
    %v280 = vadd.f32 0.0, %v279
    %v281 = vpop.f32.mrb[0].mxu0
    %282 = vmatprep.mubr.f32.mxu0 0.0
    %283 = vmatmul.mubr.f32.gmra.mrb[0].mxu0 %v116
    %v284 = vpop.f32.mrb[0].mxu0
    %v285 = vadd.f32 0.0, %v284
    %v286 = vpop.f32.mrb[0].mxu0
    %287 = vmatprep.mubr.f32.mxu0 0.0
    %288 = vmatmul.mubr.f32.gmra.mrb[0].mxu0 %v119
    %v289 = vpop.f32.mrb[0].mxu0
    %v290 = vadd.f32 0.0, %v289
    %v291 = vpop.f32.mrb[0].mxu0
    %292 = vmatprep.mubr.f32.mxu0 0.0
    %293 = vmatmul.mubr.f32.gmra.mrb[0].mxu0 %v122
    %v294 = vpop.f32.mrb[0].mxu0
    %v295 = vadd.f32 0.0, %v294
    %v296 = vpop.f32.mrb[0].mxu0
    %297 = vdwg.mxu0
    %v298 = vld [vmem:[#allocation5] sm:$0xff]
    %v299 = vld [vmem:[#allocation5 + $0x8] sm:$0xff]
    %v300 = vld [vmem:[#allocation5 + $0x10] sm:$0xff]
    %v301 = vld [vmem:[#allocation5 + $0x18] sm:$0xff]
    %v302 = vld [vmem:[#allocation5 + $0x20] sm:$0xff]
    %v303 = vld [vmem:[#allocation5 + $0x28] sm:$0xff]
    %v304 = vadd.f32 %v191, %v298
    %v305 = vadd.f32 %v193, %v299
    %v306 = vadd.f32 %v280, %v300
    %v307 = vadd.f32 %v197, %v301
    %v308 = vadd.f32 %v199, %v302
    %v309 = vadd.f32 %v285, %v303
    %v310 = vadd.f32 %v203, %v298
    %v311 = vadd.f32 %v205, %v299
    %v312 = vadd.f32 %v290, %v300
    %v313 = vadd.f32 %v209, %v301
    %v314 = vadd.f32 %v211, %v302
    %v315 = vadd.f32 %v295, %v303
    %v316 = vadd.f32 %v304, %v307
    %v317 = vrot.slane %v316, 4
    %v318 = vadd.f32 %v316, %v317
    %v319 = vrot.slane %v318, 2
    %v320 = vadd.f32 %v318, %v319
    %v321 = vrot.slane %v320, 1
    %v322 = vadd.f32 %v320, %v321
    %v323 = vadd.f32 %v305, %v308
    %v324 = vrot.slane %v323, 4
    %v325 = vadd.f32 %v323, %v324
    %v326 = vrot.slane %v325, 2
    %v327 = vadd.f32 %v325, %v326
    %v328 = vrot.slane %v327, 1
    %v329 = vadd.f32 %v327, %v328
    %v330 = vadd.f32 %v306, %v309
    %v331 = vrot.slane %v330, 4
    %v332 = vadd.f32 %v330, %v331
    %v333 = vrot.slane %v332, 2
    %v334 = vadd.f32 %v332, %v333
    %v335 = vrot.slane %v334, 1
    %v336 = vadd.f32 %v334, %v335
    %v337 = vadd.f32 %v310, %v313
    %v338 = vrot.slane %v337, 4
    %v339 = vadd.f32 %v337, %v338
    %v340 = vrot.slane %v339, 2
    %v341 = vadd.f32 %v339, %v340
    %v342 = vrot.slane %v341, 1
    %v343 = vadd.f32 %v341, %v342
    %v344 = vadd.f32 %v311, %v314
    %v345 = vrot.slane %v344, 4
    %v346 = vadd.f32 %v344, %v345
    %v347 = vrot.slane %v346, 2
    %v348 = vadd.f32 %v346, %v347
    %v349 = vrot.slane %v348, 1
    %v350 = vadd.f32 %v348, %v349
    %v351 = vadd.f32 %v312, %v315
    %v352 = vrot.slane %v351, 4
    %v353 = vadd.f32 %v351, %v352
    %v354 = vrot.slane %v353, 2
    %v355 = vadd.f32 %v353, %v354
    %v356 = vrot.slane %v355, 1
    %v357 = vadd.f32 %v355, %v356
    %v358 = vrcp.pop 16.0
    %v359 = vmul.f32 %v322, %v358
    %v360 = vmul.f32 %v329, %v358
    %v361 = vmul.f32 %v336, %v358
    %v362 = vmul.f32 %v343, %v358
    %v363 = vmul.f32 %v350, %v358
    %v364 = vmul.f32 %v357, %v358
    %v365 = vld [vmem:[%s2] sm:$0x7]
    %v367 = vlaneseq
    %v368 = vshrl.u32 %v367, 7
    %v369 = vsub.s32 0, %v368
    %v370 = vrot.slane %v365, %v369
    %v371 = vlaneseq
    %v372 = vshrl.u32 %v371, 7
    %v373 = vsub.s32 1, %v372
    %v374 = vrot.slane %v365, %v373
    %v375 = vlaneseq
    %v376 = vshrl.u32 %v375, 7
    %v377 = vsub.s32 2, %v376
    %v378 = vrot.slane %v365, %v377
    %v382 = vadd.f32 %v359, %v370
    %v383 = vadd.f32 %v360, %v374
    %v384 = vadd.f32 %v361, %v378
    %v385 = vadd.f32 %v362, %v370
    %v386 = vadd.f32 %v363, %v374
    %v387 = vadd.f32 %v364, %v378
    %v388 = vld [vmem:[#allocation8] sm:$0xff]
    %v389 = vld [vmem:[#allocation8 + $0x8] sm:$0xff]
    %v390 = vld [vmem:[#allocation8 + $0x10] sm:$0xff]
    %v391 = vld [vmem:[#allocation8 + $0x18] sm:$0xff]
    %v392 = vld [vmem:[#allocation8 + $0x20] sm:$0xff]
    %v393 = vld [vmem:[#allocation8 + $0x28] sm:$0xff]
    %v394 = vld [vmem:[#allocation8 + $0x30] sm:$0xff]
    %v395 = vld [vmem:[#allocation8 + $0x38] sm:$0xff]
    %v396 = vld [vmem:[#allocation8 + $0x40] sm:$0xff]
    %v397 = vld [vmem:[#allocation8 + $0x48] sm:$0xff]
    %v398 = vld [vmem:[#allocation8 + $0x50] sm:$0xff]
    %v399 = vld [vmem:[#allocation8 + $0x58] sm:$0xff]
    %v400 = vld [vmem:[#allocation8 + $0x60] sm:$0xff]
    %v401 = vld [vmem:[#allocation8 + $0x68] sm:$0xff]
    %v402 = vld [vmem:[#allocation8 + $0x70] sm:$0xff]
    %v403 = vld [vmem:[#allocation8 + $0x78] sm:$0xff]
    %v404 = vlaneseq
    %v405 = vshrl.u32 %v404, 7
    %v406 = vsub.s32 0, %v405
    %v407 = vrot.slane %v382, %v406
    %v408 = vlaneseq
    %v409 = vshrl.u32 %v408, 7
    %v410 = vsub.s32 0, %v409
    %v411 = vrot.slane %v385, %v410
    %v412 = vmul.f32 %v407, %v305
    %v413 = vmul.f32 %v407, %v308
    %v414 = vmul.f32 %v411, %v311
    %v415 = vmul.f32 %v411, %v314
    %416 = vmatprep.subr.mxu0 0.0
    %417 = vmatpush1.msra.mxu0 %v388
    %418 = vmatprep.subr.mxu0 0.0
    %419 = vmatpush1.msra.mxu0 %v389
    %420 = vmatprep.subr.mxu0 0.0
    %421 = vmatpush1.msra.mxu0 %v390
    %422 = vmatprep.subr.mxu0 0.0
    %423 = vmatpush1.msra.mxu0 %v391
    %424 = vmatprep.subr.mxu0 0.0
    %425 = vmatpush1.msra.mxu0 %v392
    %426 = vmatprep.subr.mxu0 0.0
    %427 = vmatpush1.msra.mxu0 %v393
    %428 = vmatprep.subr.mxu0 0.0
    %429 = vmatpush1.msra.mxu0 %v394
    %430 = vmatprep.subr.mxu0 0.0
    %431 = vmatpush1.msra.mxu0 %v395
    %432 = vmatprep.subr.mxu0 0.0
    %433 = vmatpush1.msra.mxu0 %v396
    %434 = vmatprep.subr.mxu0 0.0
    %435 = vmatpush1.msra.mxu0 %v397
    %436 = vmatprep.subr.mxu0 0.0
    %437 = vmatpush1.msra.mxu0 %v398
    %438 = vmatprep.subr.mxu0 0.0
    %439 = vmatpush1.msra.mxu0 %v399
    %440 = vmatprep.subr.mxu0 0.0
    %441 = vmatpush1.msra.mxu0 %v400
    %442 = vmatprep.subr.mxu0 0.0
    %443 = vmatpush1.msra.mxu0 %v401
    %444 = vmatprep.subr.mxu0 0.0
    %445 = vmatpush1.msra.mxu0 %v402
    %446 = vmatprep.subr.mxu0 0.0
    %447 = vmatpush1.msra.mxu0 %v403
    %448 = vmatprep.subr.mxu0 0.0
    %449 = vmatpush1.msra.mxu0 0.0
    %450 = vmatprep.subr.mxu0 0.0
    %451 = vmatpush1.msra.mxu0 0.0
    %452 = vmatprep.subr.mxu0 0.0
    %453 = vmatpush1.msra.mxu0 0.0
    %454 = vmatprep.subr.mxu0 0.0
    %455 = vmatpush1.msra.mxu0 0.0
    %456 = vmatprep.subr.mxu0 0.0
    %457 = vmatpush1.msra.mxu0 0.0
    %458 = vmatprep.subr.mxu0 0.0
    %459 = vmatpush1.msra.mxu0 0.0
    %460 = vmatprep.subr.mxu0 0.0
    %461 = vmatpush1.msra.mxu0 0.0
    %462 = vmatprep.subr.mxu0 0.0
    %463 = vmatpush1.msra.mxu0 0.0
    %464 = vmatprep.subr.mxu0 0.0
    %465 = vmatpush1.msra.mxu0 0.0
    %466 = vmatprep.subr.mxu0 0.0
    %467 = vmatpush1.msra.mxu0 0.0
    %468 = vmatprep.subr.mxu0 0.0
    %469 = vmatpush1.msra.mxu0 0.0
    %470 = vmatprep.subr.mxu0 0.0
    %471 = vmatpush1.msra.mxu0 0.0
    %472 = vmatprep.subr.mxu0 0.0
    %473 = vmatpush1.msra.mxu0 0.0
    %474 = vmatprep.subr.mxu0 0.0
    %475 = vmatpush1.msra.mxu0 0.0
    %476 = vmatprep.subr.mxu0 0.0
    %477 = vmatpush1.msra.mxu0 0.0
    %478 = vmatprep.subr.mxu0 0.0
    %479 = vmatpush1.msra.mxu0 0.0
    %480 = vmatprep.mubr.f32.mxu0 0.0
    %481 = vmatmul.mubr.f32.gmra.mrb[0].mxu0 %v412
    %v482 = vpop.f32.mrb[0].mxu0
    %v483 = vadd.f32 0.0, %v482
    %v484 = vpop.f32.mrb[0].mxu0
    %485 = vmatprep.mubr.f32.mxu0 0.0
    %486 = vmatmul.mubr.f32.gmra.mrb[0].mxu0 %v413
    %v487 = vpop.f32.mrb[0].mxu0
    %v488 = vadd.f32 0.0, %v487
    %v489 = vpop.f32.mrb[0].mxu0
    %490 = vmatprep.mubr.f32.mxu0 0.0
    %491 = vmatmul.mubr.f32.gmra.mrb[0].mxu0 %v414
    %v492 = vpop.f32.mrb[0].mxu0
    %v493 = vadd.f32 0.0, %v492
    %v494 = vpop.f32.mrb[0].mxu0
    %495 = vmatprep.mubr.f32.mxu0 0.0
    %496 = vmatmul.mubr.f32.gmra.mrb[0].mxu0 %v415
    %v497 = vpop.f32.mrb[0].mxu0
    %v498 = vadd.f32 0.0, %v497
    %v499 = vpop.f32.mrb[0].mxu0
    %500 = vdwg.mxu0
    %v501 = vmul.f32 %v382, %v383
    %v502 = vmul.f32 %v385, %v386
    %v505 = vrot.slane %v502, 7
    %vm506 = vcmask 1041409
    %v507 = vsel %vm506, %v505, %v501
    %509 = vmatprep.subr.mxu0 0.0
    %510 = vmatpush1.msra.mxu0 %v388
    %511 = vmatprep.subr.mxu0 0.0
    %512 = vmatpush1.msra.mxu0 %v389
    %513 = vmatprep.subr.mxu0 0.0
    %514 = vmatpush1.msra.mxu0 %v390
    %515 = vmatprep.subr.mxu0 0.0
    %516 = vmatpush1.msra.mxu0 %v391
    %517 = vmatprep.subr.mxu0 0.0
    %518 = vmatpush1.msra.mxu0 %v392
    %519 = vmatprep.subr.mxu0 0.0
    %520 = vmatpush1.msra.mxu0 %v393
    %521 = vmatprep.subr.mxu0 0.0
    %522 = vmatpush1.msra.mxu0 %v394
    %523 = vmatprep.subr.mxu0 0.0
    %524 = vmatpush1.msra.mxu0 %v395
    %525 = vmatprep.subr.mxu0 0.0
    %526 = vmatpush1.msra.mxu0 %v396
    %527 = vmatprep.subr.mxu0 0.0
    %528 = vmatpush1.msra.mxu0 %v397
    %529 = vmatprep.subr.mxu0 0.0
    %530 = vmatpush1.msra.mxu0 %v398
    %531 = vmatprep.subr.mxu0 0.0
    %532 = vmatpush1.msra.mxu0 %v399
    %533 = vmatprep.subr.mxu0 0.0
    %534 = vmatpush1.msra.mxu0 %v400
    %535 = vmatprep.subr.mxu0 0.0
    %536 = vmatpush1.msra.mxu0 %v401
    %537 = vmatprep.subr.mxu0 0.0
    %538 = vmatpush1.msra.mxu0 %v402
    %539 = vmatprep.subr.mxu0 0.0
    %540 = vmatpush1.msra.mxu0 %v403
    %541 = vmatprep.subr.mxu0 0.0
    %542 = vmatpush1.msra.mxu0 0.0
    %543 = vmatprep.subr.mxu0 0.0
    %544 = vmatpush1.msra.mxu0 0.0
    %545 = vmatprep.subr.mxu0 0.0
    %546 = vmatpush1.msra.mxu0 0.0
    %547 = vmatprep.subr.mxu0 0.0
    %548 = vmatpush1.msra.mxu0 0.0
    %549 = vmatprep.subr.mxu0 0.0
    %550 = vmatpush1.msra.mxu0 0.0
    %551 = vmatprep.subr.mxu0 0.0
    %552 = vmatpush1.msra.mxu0 0.0
    %553 = vmatprep.subr.mxu0 0.0
    %554 = vmatpush1.msra.mxu0 0.0
    %555 = vmatprep.subr.mxu0 0.0
    %556 = vmatpush1.msra.mxu0 0.0
    %557 = vmatprep.subr.mxu0 0.0
    %558 = vmatpush1.msra.mxu0 0.0
    %559 = vmatprep.subr.mxu0 0.0
    %560 = vmatpush1.msra.mxu0 0.0
    %561 = vmatprep.subr.mxu0 0.0
    %562 = vmatpush1.msra.mxu0 0.0
    %563 = vmatprep.subr.mxu0 0.0
    %564 = vmatpush1.msra.mxu0 0.0
    %565 = vmatprep.subr.mxu0 0.0
    %566 = vmatpush1.msra.mxu0 0.0
    %567 = vmatprep.subr.mxu0 0.0
    %568 = vmatpush1.msra.mxu0 0.0
    %569 = vmatprep.subr.mxu0 0.0
    %570 = vmatpush1.msra.mxu0 0.0
    %571 = vmatprep.subr.mxu0 0.0
    %572 = vmatpush1.msra.mxu0 0.0
    %573 = vmatprep.mubr.f32.mxu0 0.0
    %574 = vmatmul.mubr.f32.gmra.mrb[0].mxu0 %v507
    %v575 = vpop.f32.mrb[0].mxu0
    %v576 = vadd.f32 0.0, %v575
    %v577 = vpop.f32.mrb[0].mxu0
    %578 = vdwg.mxu0
    %v579 = vmax.f32 %v483, %v488
    %v580 = vrot.slane %v579, 4
    %v581 = vmax.f32 %v579, %v580
    %v582 = vrot.slane %v581, 2
    %v583 = vmax.f32 %v581, %v582
    %v584 = vrot.slane %v583, 1
    %v585 = vmax.f32 %v583, %v584
    %v586 = vmax.f32 %v493, %v498
    %v587 = vrot.slane %v586, 4
    %v588 = vmax.f32 %v586, %v587
    %v589 = vrot.slane %v588, 2
    %v590 = vmax.f32 %v588, %v589
    %v591 = vrot.slane %v590, 1
    %v592 = vmax.f32 %v590, %v591
    %v594 = vrot.slane %v576, 1
    %v597 = vmax.f32 %v585, %v576
    %v598 = vmax.f32 %v592, %v594
    %v599 = vlaneseq
    %v600 = vshrl.u32 %v599, 7
    %v601 = vsub.s32 0, %v600
    %v602 = vrot.slane %v597, %v601
    %v603 = vlaneseq
    %v604 = vshrl.u32 %v603, 7
    %v605 = vsub.s32 0, %v604
    %v606 = vrot.slane %v598, %v605
    %v607 = vsub.f32 %v483, %v602
    %v608 = vsub.f32 %v488, %v602
    %v609 = vsub.f32 %v493, %v606
    %v610 = vsub.f32 %v498, %v606
    %v611 = vmul.f32 %v607, 1.442695
    %v612 = vpow.pop %v611
    %v613 = vmul.f32 %v608, 1.442695
    %v614 = vpow.pop %v613
    %v615 = vmul.f32 %v609, 1.442695
    %v616 = vpow.pop %v615
    %v617 = vmul.f32 %v610, 1.442695
    %v618 = vpow.pop %v617
    %v621 = vrot.slane %v598, 7
    %v622 = vsel %vm506, %v621, %v597
    %v624 = vsub.f32 %v576, %v622
    %v625 = vmul.f32 %v624, 1.442695
    %v626 = vpow.pop %v625
    %v627 = vadd.f32 %v612, %v614
    %v628 = vrot.slane %v627, 4
    %v629 = vadd.f32 %v627, %v628
    %v630 = vrot.slane %v629, 2
    %v631 = vadd.f32 %v629, %v630
    %v632 = vrot.slane %v631, 1
    %v633 = vadd.f32 %v631, %v632
    %v634 = vadd.f32 %v616, %v618
    %v635 = vrot.slane %v634, 4
    %v636 = vadd.f32 %v634, %v635
    %v637 = vrot.slane %v636, 2
    %v638 = vadd.f32 %v636, %v637
    %v639 = vrot.slane %v638, 1
    %v640 = vadd.f32 %v638, %v639
    %v642 = vrot.slane %v626, 1
    %v645 = vadd.f32 %v633, %v626
    %v646 = vadd.f32 %v640, %v642
    %v647 = vrcp.pop %v645
    %v648 = vrcp.pop %v646
    %v649 = vmul.f32 %v612, %v306
    %v650 = vmul.f32 %v614, %v309
    %v651 = vmul.f32 %v616, %v312
    %v652 = vmul.f32 %v618, %v315
    %v653 = vadd.f32 %v649, %v650
    %v654 = vrot.slane %v653, 4
    %v655 = vadd.f32 %v653, %v654
    %v656 = vrot.slane %v655, 2
    %v657 = vadd.f32 %v655, %v656
    %v658 = vrot.slane %v657, 1
    %v659 = vadd.f32 %v657, %v658
    %v660 = vadd.f32 %v651, %v652
    %v661 = vrot.slane %v660, 4
    %v662 = vadd.f32 %v660, %v661
    %v663 = vrot.slane %v662, 2
    %v664 = vadd.f32 %v662, %v663
    %v665 = vrot.slane %v664, 1
    %v666 = vadd.f32 %v664, %v665
    %v669 = vrot.slane %v387, 7
    %v670 = vsel %vm506, %v669, %v384
    %v672 = vmul.f32 %v626, %v670
    %v674 = vrot.slane %v672, 1
    %v677 = vadd.f32 %v659, %v672
    %v678 = vadd.f32 %v666, %v674
    %v679 = vmul.f32 %v677, %v647
    %v680 = vmul.f32 %v678, %v648
    %v681 = vld [vmem:[#allocation10] sm:$0xff]
    %v682 = vld [vmem:[#allocation10 + $0x8] sm:$0xff]
    %v683 = vld [vmem:[#allocation10 + $0x10] sm:$0xff]
    %v684 = vld [vmem:[#allocation10 + $0x18] sm:$0xff]
    %v685 = vld [vmem:[#allocation10 + $0x20] sm:$0xff]
    %v686 = vld [vmem:[#allocation10 + $0x28] sm:$0xff]
    %v687 = vld [vmem:[#allocation10 + $0x30] sm:$0xff]
    %v688 = vld [vmem:[#allocation10 + $0x38] sm:$0xff]
    %v689 = vld [vmem:[#allocation10 + $0x40] sm:$0xff]
    %v690 = vld [vmem:[#allocation10 + $0x48] sm:$0xff]
    %v691 = vld [vmem:[#allocation10 + $0x50] sm:$0xff]
    %v692 = vld [vmem:[#allocation10 + $0x58] sm:$0xff]
    %v693 = vld [vmem:[#allocation10 + $0x60] sm:$0xff]
    %v694 = vld [vmem:[#allocation10 + $0x68] sm:$0xff]
    %v695 = vld [vmem:[#allocation10 + $0x70] sm:$0xff]
    %v696 = vld [vmem:[#allocation10 + $0x78] sm:$0xff]
    %v697 = vld [vmem:[%s6] sm:$0x1]
    %v699 = vlaneseq
    %v700 = vshrl.u32 %v699, 7
    %v701 = vsub.s32 0, %v700
    %v702 = vrot.slane %v697, %v701
    %v706 = vrot.slane %v680, 7
    %v707 = vsel %vm506, %v706, %v679
    %709 = vmatprep.subr.mxu0 0.0
    %710 = vmatpush1.msra.mxu0 %v681
    %711 = vmatprep.subr.mxu0 0.0
    %712 = vmatpush1.msra.mxu0 %v682
    %713 = vmatprep.subr.mxu0 0.0
    %714 = vmatpush1.msra.mxu0 %v683
    %715 = vmatprep.subr.mxu0 0.0
    %716 = vmatpush1.msra.mxu0 %v684
    %717 = vmatprep.subr.mxu0 0.0
    %718 = vmatpush1.msra.mxu0 %v685
    %719 = vmatprep.subr.mxu0 0.0
    %720 = vmatpush1.msra.mxu0 %v686
    %721 = vmatprep.subr.mxu0 0.0
    %722 = vmatpush1.msra.mxu0 %v687
    %723 = vmatprep.subr.mxu0 0.0
    %724 = vmatpush1.msra.mxu0 %v688
    %725 = vmatprep.subr.mxu0 0.0
    %726 = vmatpush1.msra.mxu0 %v689
    %727 = vmatprep.subr.mxu0 0.0
    %728 = vmatpush1.msra.mxu0 %v690
    %729 = vmatprep.subr.mxu0 0.0
    %730 = vmatpush1.msra.mxu0 %v691
    %731 = vmatprep.subr.mxu0 0.0
    %732 = vmatpush1.msra.mxu0 %v692
    %733 = vmatprep.subr.mxu0 0.0
    %734 = vmatpush1.msra.mxu0 %v693
    %735 = vmatprep.subr.mxu0 0.0
    %736 = vmatpush1.msra.mxu0 %v694
    %737 = vmatprep.subr.mxu0 0.0
    %738 = vmatpush1.msra.mxu0 %v695
    %739 = vmatprep.subr.mxu0 0.0
    %740 = vmatpush1.msra.mxu0 %v696
    %741 = vmatprep.subr.mxu0 0.0
    %742 = vmatpush1.msra.mxu0 0.0
    %743 = vmatprep.subr.mxu0 0.0
    %744 = vmatpush1.msra.mxu0 0.0
    %745 = vmatprep.subr.mxu0 0.0
    %746 = vmatpush1.msra.mxu0 0.0
    %747 = vmatprep.subr.mxu0 0.0
    %748 = vmatpush1.msra.mxu0 0.0
    %749 = vmatprep.subr.mxu0 0.0
    %750 = vmatpush1.msra.mxu0 0.0
    %751 = vmatprep.subr.mxu0 0.0
    %752 = vmatpush1.msra.mxu0 0.0
    %753 = vmatprep.subr.mxu0 0.0
    %754 = vmatpush1.msra.mxu0 0.0
    %755 = vmatprep.subr.mxu0 0.0
    %756 = vmatpush1.msra.mxu0 0.0
    %757 = vmatprep.subr.mxu0 0.0
    %758 = vmatpush1.msra.mxu0 0.0
    %759 = vmatprep.subr.mxu0 0.0
    %760 = vmatpush1.msra.mxu0 0.0
    %761 = vmatprep.subr.mxu0 0.0
    %762 = vmatpush1.msra.mxu0 0.0
    %763 = vmatprep.subr.mxu0 0.0
    %764 = vmatpush1.msra.mxu0 0.0
    %765 = vmatprep.subr.mxu0 0.0
    %766 = vmatpush1.msra.mxu0 0.0
    %767 = vmatprep.subr.mxu0 0.0
    %768 = vmatpush1.msra.mxu0 0.0
    %769 = vmatprep.subr.mxu0 0.0
    %770 = vmatpush1.msra.mxu0 0.0
    %771 = vmatprep.subr.mxu0 0.0
    %772 = vmatpush1.msra.mxu0 0.0
    %773 = vmatprep.mubr.f32.mxu0 0.0
    %774 = vmatmul.mubr.f32.gmra.mrb[0].mxu0 %v707
    %v775 = vpop.f32.mrb[0].mxu0
    %v776 = vadd.f32 %v702, %v775
    %v777 = vpop.f32.mrb[0].mxu0
    %778 = vdwg.mxu0
    %779 = vst [vmem:[#allocation11] sm:$0x3] %v776
    // Predicated region
    $region50: #{tpu_custom_call.1} parent=1 // pred_check
      _
    $region51: #{tpu_custom_call.1} parent=1 // pred_check_branch
      %781 = sbr.rel (0) target = $region53
    $region52: #{tpu_custom_call.1} parent=1 // pred_region
      %s783 = ssub.s32 32, 32
      %784 = vsyncadd [#allocation4], %s783
      %s786 = sshll.u32 [#allocation11], 4
      %s787 = int_to_ptr.vmem [resolvable:$true] %s786
      %789 = dma.vmem_to_hbm [thread:$0]  %s787, 32, %s7, [#allocation4]
    $region53: #{tpu_custom_call.1} parent=1 // pred_fallthru
      _
    // Predicated region
    $region54: #{tpu_custom_call.1} parent=1 // pred_check
      _
    $region55: #{tpu_custom_call.1} parent=1 // pred_check_branch
      %791 = sbr.rel (0) target = $region57
    $region56: #{tpu_custom_call.1} parent=1 // pred_region
      %792 = dma.done [#allocation4], 32
    $region57: #{tpu_custom_call.1} parent=1 // pred_fallthru
      _
    %793 = vsyncpa [#allocation3], 1
    %794 = vsyncpa [#allocation6], 1
    %795 = vsyncpa [#allocation9], 1
    %796 = vsyncpa [#allocation4], 1

</llo_original>
